<compile_context>
chip_gen: v5e
topology: v5e:2x2
jax: 0.10.0
libtpu: 0.0.40
codegen_flags: <defaults>
</compile_context>

<pallas_src>
import jax
import jax.numpy as jnp
from jax.experimental import pallas as pl
from jax.experimental.pallas import tpu as pltpu

# ----------------------------------------------------------------------------
# Problem dimensions (consistent with the module's forward()).
# ----------------------------------------------------------------------------
STATE_DIM = {"waypoints": 10, "ego_vehicle": 6, "vehicle_front": 4}
ACTION_DIM = 2
HIDDEN_BRANCH = 32            # each fc1_* maps to 32
HIDDEN = 4 * HIDDEN_BRANCH    # 128
BATCH = 8

D_WP = STATE_DIM["waypoints"]
D_EV = STATE_DIM["ego_vehicle"]
D_VF = STATE_DIM["vehicle_front"]
D_STATE = D_WP + D_EV + D_VF          # 20

MAX_BATCH_TILE = 1024                 # rows per grid step when batch is large


def _round_up(n, m):
    return ((n + m - 1) // m) * m


# ----------------------------------------------------------------------------
# Fused kernel.
#   Stage 1: four branch Linears + ReLU as two block-diagonal MXU passes.
#   Stage 2: fc2 + ReLU (MXU).
#   Stage 3: fc_out as a (1,128) x (tb,128)^T matvec -> lane-dense (1, tb) row.
# ----------------------------------------------------------------------------
def qvalue_kernel(state_ref, action_ref, w1s_ref, w1a_ref, b1_ref,
                  w2_ref, b2_ref, wo_ref, bo_ref, out_ref):
    # Stage 1: block-diagonal packing means column blocks [0:32,32:64,64:96,96:128]
    # equal relu(fc1_1(s_wp)), relu(fc1_2(s_ev)), relu(fc1_3(s_vf)), relu(fc1_4(a)).
    acc = (jnp.dot(state_ref[...], w1s_ref[...],
                   preferred_element_type=jnp.float32)
           + jnp.dot(action_ref[...], w1a_ref[...],
                     preferred_element_type=jnp.float32)
           + b1_ref[...])                                     # (tb, 128) f32
    h = jnp.maximum(acc, 0.0)

    # Stage 2: fc2 + ReLU.  Cast back to the weight compute dtype (no-op in f32
    # mode, bf16 in throughput mode); accumulate in f32 on the MXU.
    hidden = jnp.maximum(
        jnp.dot(h.astype(w2_ref.dtype), w2_ref[...],
                preferred_element_type=jnp.float32)
        + b2_ref[...], 0.0)                                   # (tb, 128) f32

    # Stage 3: fc_out.  Contract the 128-dim with wo as the (1,128) lhs so the
    # result comes out directly as a lane-dense (1, tb) row (no masked vst.msk
    # of a last-dim-1 column, no XLU transpose of the reduction result).
    q_row = jax.lax.dot_general(
        wo_ref[...], hidden, (((1,), (1,)), ((), ())),
        preferred_element_type=jnp.float32)                   # (1, tb)
    out_ref[0] = q_row + bo_ref[0]                            # (1, 1, tb) block


# ----------------------------------------------------------------------------
# Wrapper: tile batch over a "parallel" grid, keep weights VMEM-resident,
# emit a lane-dense (grid, 1, tb) output slab and reshape to (B, 1).
# ----------------------------------------------------------------------------
def qvalue_forward(state, action, packed_params):
    """Pallas-backed QValueNet.forward. packed_params from pack_params()."""
    w1_s, w1_a, b1, w2, b2, wo_row, bo = packed_params
    B = state.shape[0]
    compute_dtype = w1_s.dtype

    state = state.astype(compute_dtype)
    action = action.astype(compute_dtype)

    # Batch tile: multiple of the sublane packing (8 f32 / 16 bf16).  For
    # medium/large batches aim for >= 2 grid steps so v7x's two TensorCores
    # both get work on the "parallel" axis; cap at MAX_BATCH_TILE.
    sub = 16 if compute_dtype == jnp.bfloat16 else 8
    if B <= sub:
        tb = sub
    else:
        tb = min(_round_up(pl.cdiv(B, 2), sub), MAX_BATCH_TILE)
    bp = _round_up(B, tb)
    if bp != B:
        pad = ((0, bp - B), (0, 0))
        state = jnp.pad(state, pad)
        action = jnp.pad(action, pad)
    grid = bp // tb

    # Constant block index -> Pallas reuses the resident VMEM buffer across grid
    # steps (weights are not re-DMA'd per step).
    resident = lambda i: (0, 0)

    out = pl.pallas_call(
        qvalue_kernel,
        out_shape=jax.ShapeDtypeStruct((grid, 1, tb), jnp.float32),
        grid=(grid,),
        in_specs=[
            pl.BlockSpec((tb, D_STATE), lambda i: (i, 0)),      # state
            pl.BlockSpec((tb, ACTION_DIM), lambda i: (i, 0)),   # action
            pl.BlockSpec((D_STATE, HIDDEN), resident),          # w1_s (block-diag)
            pl.BlockSpec((ACTION_DIM, HIDDEN), resident),       # w1_a (block-diag)
            pl.BlockSpec((1, HIDDEN), resident),                # b1
            pl.BlockSpec((HIDDEN, HIDDEN), resident),           # w2
            pl.BlockSpec((1, HIDDEN), resident),                # b2
            pl.BlockSpec((1, HIDDEN), resident),                # wo (row)
            pl.BlockSpec(memory_space=pltpu.MemorySpace.SMEM),  # bo scalar
        ],
        out_specs=pl.BlockSpec((1, 1, tb), lambda i: (i, 0, 0)),  # lane-dense row
        compiler_params=pltpu.CompilerParams(
            dimension_semantics=("parallel",),
            vmem_limit_bytes=8 * 1024 * 1024,
        ),
    )(state, action, w1_s, w1_a, b1, w2, b2, wo_row, bo)

    # (grid, 1, tb) -> (bp, 1); padded rows (relu-of-bias garbage) are sliced off.
    return out.reshape(bp, 1)[:B]


# ----------------------------------------------------------------------------
# Parameter init (torch.nn.Linear-style uniform(+-1/sqrt(fan_in))) and packing.
# Per-branch weights are (in_features, out_features); biases (1, out_features).
# ----------------------------------------------------------------------------
def init_linear(key, fan_in, fan_out):
    kw, kb = jax.random.split(key)
    bound = 1.0 / jnp.sqrt(jnp.float32(fan_in))
    w = jax.random.uniform(kw, (fan_in, fan_out), jnp.float32, -bound, bound)
    b = jax.random.uniform(kb, (1, fan_out), jnp.float32, -bound, bound)
    return w, b


def init_params(key):
    keys = jax.random.split(key, 6)
    w11, b11 = init_linear(keys[0], D_WP, HIDDEN_BRANCH)
    w12, b12 = init_linear(keys[1], D_EV, HIDDEN_BRANCH)
    w13, b13 = init_linear(keys[2], D_VF, HIDDEN_BRANCH)
    w14, b14 = init_linear(keys[3], ACTION_DIM, HIDDEN_BRANCH)
    w2, b2 = init_linear(keys[4], HIDDEN, HIDDEN)
    wo, bo = init_linear(keys[5], HIDDEN, 1)
    return (w11, b11, w12, b12, w13, b13, w14, b14, w2, b2, wo, bo)


def pack_params(branch_params, compute_dtype=jnp.float32):
    """Pack the 4 branch Linears into block-diagonal weights split by input.

    compute_dtype=jnp.bfloat16 stores the MXU operands (w1_s, w1_a, w2) in bf16
    for the large-batch throughput regime; accumulation stays f32 in-kernel and
    biases / wo / bo stay f32.
    """
    (w11, b11, w12, b12, w13, b13, w14, b14, w2, b2, wo, bo) = branch_params
    hb = HIDDEN_BRANCH
    w1_s = jnp.zeros((D_STATE, HIDDEN), jnp.float32)          # zeros are exact
    w1_s = w1_s.at[0:D_WP, 0 * hb:1 * hb].set(w11)
    w1_s = w1_s.at[D_WP:D_WP + D_EV, 1 * hb:2 * hb].set(w12)
    w1_s = w1_s.at[D_WP + D_EV:D_STATE, 2 * hb:3 * hb].set(w13)
    w1_a = jnp.zeros((ACTION_DIM, HIDDEN), jnp.float32)
    w1_a = w1_a.at[:, 3 * hb:4 * hb].set(w14)
    b1 = jnp.concatenate((b11, b12, b13, b14), axis=-1)        # (1, 128) f32
    wo_row = wo.T                                              # (1, 128) f32
    bo_flat = bo.reshape((1,))                                 # (1,) f32, -> SMEM
    return (w1_s.astype(compute_dtype), w1_a.astype(compute_dtype),
            b1, w2.astype(compute_dtype), b2, wo_row, bo_flat)


# ----------------------------------------------------------------------------
# Pure-JAX reference (mirrors the torch forward exactly, per-branch, f32).
# ----------------------------------------------------------------------------
def qvalue_reference(state, action, branch_params):
    (w11, b11, w12, b12, w13, b13, w14, b14, w2, b2, wo, bo) = branch_params
    s_wp = state[:, :D_WP]
    s_ev = state[:, D_WP:D_WP + D_EV]        # == state[:, -(vf+ev):-vf]
    s_vf = state[:, D_STATE - D_VF:]         # == state[:, -vf:]
    h = jnp.concatenate(
        (jax.nn.relu(s_wp @ w11 + b11),
         jax.nn.relu(s_ev @ w12 + b12),
         jax.nn.relu(s_vf @ w13 + b13),
         jax.nn.relu(action @ w14 + b14)), axis=-1)
    hidden = jax.nn.relu(h @ w2 + b2)
    return hidden @ wo + bo


if __name__ == "__main__":
    key = jax.random.PRNGKey(0)
    k_state, k_action, k_params = jax.random.split(key, 3)
    branch_params = init_params(k_params)

    # --- f32 path, nominal batch 8 (single grid step, latency-bound regime) ---
    state = jax.random.normal(k_state, (BATCH, D_STATE), jnp.float32)
    action = jax.random.normal(k_action, (BATCH, ACTION_DIM), jnp.float32)
    packed_f32 = pack_params(branch_params, jnp.float32)
    out = jax.block_until_ready(qvalue_forward(state, action, packed_f32))
    ref = qvalue_reference(state, action, branch_params)
    assert out.shape == (BATCH, 1)
    assert jnp.allclose(out, ref, atol=1e-5, rtol=1e-5), "f32 mismatch (B=8)"

    # --- f32 path, ragged batch (exercises padding + a 2-step grid) ---
    B2 = 20
    state2 = jax.random.normal(jax.random.PRNGKey(1), (B2, D_STATE), jnp.float32)
    action2 = jax.random.normal(jax.random.PRNGKey(2), (B2, ACTION_DIM), jnp.float32)
    out2 = jax.block_until_ready(qvalue_forward(state2, action2, packed_f32))
    ref2 = qvalue_reference(state2, action2, branch_params)
    assert out2.shape == (B2, 1)
    assert jnp.allclose(out2, ref2, atol=1e-5, rtol=1e-5), "f32 mismatch (B=20)"

    # --- bf16-operand path (f32 accumulation), larger batch, 2 grid steps ---
    B3 = 64
    state3 = jax.random.normal(jax.random.PRNGKey(3), (B3, D_STATE), jnp.float32)
    action3 = jax.random.normal(jax.random.PRNGKey(4), (B3, ACTION_DIM), jnp.float32)
    packed_bf16 = pack_params(branch_params, jnp.bfloat16)
    out3 = jax.block_until_ready(qvalue_forward(state3, action3, packed_bf16))
    ref3 = qvalue_reference(state3, action3, branch_params)
    assert out3.shape == (B3, 1)
    assert jnp.allclose(out3, ref3, atol=5e-2, rtol=5e-2), "bf16 mismatch (B=64)"

    print("KERNEL_OK")
</pallas_src>

<mosaic_0001>
module attributes {stable_mosaic.version = 11 : i64} {
  func.func @qvalue_kernel(%arg0: i32, %arg1: memref<8x20xf32, #tpu.memory_space<vmem>>, %arg2: memref<8x2xf32, #tpu.memory_space<vmem>>, %arg3: memref<20x128xf32, #tpu.memory_space<vmem>>, %arg4: memref<2x128xf32, #tpu.memory_space<vmem>>, %arg5: memref<1x128xf32, #tpu.memory_space<vmem>>, %arg6: memref<128x128xf32, #tpu.memory_space<vmem>>, %arg7: memref<1x128xf32, #tpu.memory_space<vmem>>, %arg8: memref<1x128xf32, #tpu.memory_space<vmem>>, %arg9: memref<1xf32, #tpu.memory_space<smem>>, %arg10: memref<1x1x8xf32, #tpu.memory_space<vmem>>) attributes {dimension_semantics = [#tpu.dimension_semantics<parallel>], iteration_bounds = array<i64: 1>, scalar_prefetch = 0 : i64, scratch_operands = 0 : i64, tpu.core_type = #tpu.core_type<tc>, window_params = [{transform_indices = @transform_0, window_bounds = array<i64: 8, 20>}, {transform_indices = @transform_1, window_bounds = array<i64: 8, 2>}, {pipeline_mode = #tpu.pipeline_mode<synchronous>, transform_indices = @transform_2, window_bounds = array<i64: 20, 128>}, {pipeline_mode = #tpu.pipeline_mode<synchronous>, transform_indices = @transform_3, window_bounds = array<i64: 2, 128>}, {pipeline_mode = #tpu.pipeline_mode<synchronous>, transform_indices = @transform_4, window_bounds = array<i64: 1, 128>}, {pipeline_mode = #tpu.pipeline_mode<synchronous>, transform_indices = @transform_5, window_bounds = array<i64: 128, 128>}, {pipeline_mode = #tpu.pipeline_mode<synchronous>, transform_indices = @transform_6, window_bounds = array<i64: 1, 128>}, {pipeline_mode = #tpu.pipeline_mode<synchronous>, transform_indices = @transform_7, window_bounds = array<i64: 1, 128>}, {transform_indices = @transform_8, window_bounds = array<i64: 1>}, {transform_indices = @transform_9, window_bounds = array<i64: 1, 1, 8>}]} {
    %c0 = arith.constant 0 : index
    %c0_0 = arith.constant 0 : index
    %0 = vector.load %arg1[%c0, %c0_0] : memref<8x20xf32, #tpu.memory_space<vmem>>, vector<8x20xf32>
    %c0_1 = arith.constant 0 : index
    %c0_2 = arith.constant 0 : index
    %1 = vector.load %arg3[%c0_1, %c0_2] : memref<20x128xf32, #tpu.memory_space<vmem>>, vector<20x128xf32>
    %cst = arith.constant dense<0.000000e+00> : vector<8x128xf32>
    %2 = tpu.matmul %0, %1, %cst {dimension_numbers = #tpu.dot_dimension_numbers<[1], [0], [0], [1], [0, 0, 1, 1], [], []>} : vector<8x20xf32>, vector<20x128xf32>, vector<8x128xf32> -> vector<8x128xf32>
    %c0_3 = arith.constant 0 : index
    %c0_4 = arith.constant 0 : index
    %3 = vector.load %arg2[%c0_3, %c0_4] : memref<8x2xf32, #tpu.memory_space<vmem>>, vector<8x2xf32>
    %c0_5 = arith.constant 0 : index
    %c0_6 = arith.constant 0 : index
    %4 = vector.load %arg4[%c0_5, %c0_6] : memref<2x128xf32, #tpu.memory_space<vmem>>, vector<2x128xf32>
    %cst_7 = arith.constant dense<0.000000e+00> : vector<8x128xf32>
    %5 = tpu.matmul %3, %4, %cst_7 {dimension_numbers = #tpu.dot_dimension_numbers<[1], [0], [0], [1], [0, 0, 1, 1], [], []>} : vector<8x2xf32>, vector<2x128xf32>, vector<8x128xf32> -> vector<8x128xf32>
    %6 = arith.addf %2, %5 : vector<8x128xf32>
    %c0_8 = arith.constant 0 : index
    %c0_9 = arith.constant 0 : index
    %7 = vector.load %arg5[%c0_8, %c0_9] : memref<1x128xf32, #tpu.memory_space<vmem>>, vector<1x128xf32>
    %8 = vector.broadcast %7 : vector<1x128xf32> to vector<8x128xf32>
    %9 = arith.addf %6, %8 : vector<8x128xf32>
    %cst_10 = arith.constant 0.000000e+00 : f32
    %10 = vector.broadcast %cst_10 : f32 to vector<8x128xf32>
    %11 = arith.maximumf %9, %10 : vector<8x128xf32>
    %c0_11 = arith.constant 0 : index
    %c0_12 = arith.constant 0 : index
    %12 = vector.load %arg6[%c0_11, %c0_12] : memref<128x128xf32, #tpu.memory_space<vmem>>, vector<128x128xf32>
    %cst_13 = arith.constant dense<0.000000e+00> : vector<8x128xf32>
    %13 = tpu.matmul %11, %12, %cst_13 {dimension_numbers = #tpu.dot_dimension_numbers<[1], [0], [0], [1], [0, 0, 1, 1], [], []>} : vector<8x128xf32>, vector<128x128xf32>, vector<8x128xf32> -> vector<8x128xf32>
    %c0_14 = arith.constant 0 : index
    %c0_15 = arith.constant 0 : index
    %14 = vector.load %arg7[%c0_14, %c0_15] : memref<1x128xf32, #tpu.memory_space<vmem>>, vector<1x128xf32>
    %15 = vector.broadcast %14 : vector<1x128xf32> to vector<8x128xf32>
    %16 = arith.addf %13, %15 : vector<8x128xf32>
    %cst_16 = arith.constant 0.000000e+00 : f32
    %17 = vector.broadcast %cst_16 : f32 to vector<8x128xf32>
    %18 = arith.maximumf %16, %17 : vector<8x128xf32>
    %c0_17 = arith.constant 0 : index
    %c0_18 = arith.constant 0 : index
    %19 = vector.load %arg8[%c0_17, %c0_18] : memref<1x128xf32, #tpu.memory_space<vmem>>, vector<1x128xf32>
    %cst_19 = arith.constant dense<0.000000e+00> : vector<1x8xf32>
    %20 = tpu.matmul %19, %18, %cst_19 {dimension_numbers = #tpu.dot_dimension_numbers<[1], [1], [0], [0], [0, 0, 1, 0], [], []>} : vector<1x128xf32>, vector<8x128xf32>, vector<1x8xf32> -> vector<1x8xf32>
    %c0_20 = arith.constant 0 : index
    %21 = memref.load %arg9[%c0_20] : memref<1xf32, #tpu.memory_space<smem>>
    %22 = vector.broadcast %21 : f32 to vector<1x8xf32>
    %23 = arith.addf %20, %22 : vector<1x8xf32>
    %c0_21 = arith.constant 0 : index
    %c0_22 = arith.constant 0 : index
    %c0_23 = arith.constant 0 : index
    %24 = vector.load %arg10[%c0_21, %c0_22, %c0_23] : memref<1x1x8xf32, #tpu.memory_space<vmem>>, vector<1x1x8xf32>
    %25 = vector.shape_cast %24 : vector<1x1x8xf32> to vector<1x8xf32>
    %26 = vector.shape_cast %23 : vector<1x8xf32> to vector<1x1x8xf32>
    tpu.vector_store %arg10[%c0_21, %c0_22, %c0_23], %26 {strides = array<i32>} : memref<1x1x8xf32, #tpu.memory_space<vmem>>, vector<1x1x8xf32>,
    return
  }
  func.func @transform_0(%arg0: i32) -> (i32, i32) {
    %c0_i32 = arith.constant 0 : i32
    %c0_i32_0 = arith.constant 0 : i32
    return %arg0, %c0_i32 : i32, i32
  }
  func.func @transform_1(%arg0: i32) -> (i32, i32) {
    %c0_i32 = arith.constant 0 : i32
    %c0_i32_0 = arith.constant 0 : i32
    return %arg0, %c0_i32 : i32, i32
  }
  func.func @transform_2(%arg0: i32) -> (i32, i32) {
    %c0_i32 = arith.constant 0 : i32
    %c0_i32_0 = arith.constant 0 : i32
    %c0_i32_1 = arith.constant 0 : i32
    return %c0_i32, %c0_i32_0 : i32, i32
  }
  func.func @transform_3(%arg0: i32) -> (i32, i32) {
    %c0_i32 = arith.constant 0 : i32
    %c0_i32_0 = arith.constant 0 : i32
    %c0_i32_1 = arith.constant 0 : i32
    return %c0_i32, %c0_i32_0 : i32, i32
  }
  func.func @transform_4(%arg0: i32) -> (i32, i32) {
    %c0_i32 = arith.constant 0 : i32
    %c0_i32_0 = arith.constant 0 : i32
    %c0_i32_1 = arith.constant 0 : i32
    return %c0_i32, %c0_i32_0 : i32, i32
  }
  func.func @transform_5(%arg0: i32) -> (i32, i32) {
    %c0_i32 = arith.constant 0 : i32
    %c0_i32_0 = arith.constant 0 : i32
    %c0_i32_1 = arith.constant 0 : i32
    return %c0_i32, %c0_i32_0 : i32, i32
  }
  func.func @transform_6(%arg0: i32) -> (i32, i32) {
    %c0_i32 = arith.constant 0 : i32
    %c0_i32_0 = arith.constant 0 : i32
    %c0_i32_1 = arith.constant 0 : i32
    return %c0_i32, %c0_i32_0 : i32, i32
  }
  func.func @transform_7(%arg0: i32) -> (i32, i32) {
    %c0_i32 = arith.constant 0 : i32
    %c0_i32_0 = arith.constant 0 : i32
    %c0_i32_1 = arith.constant 0 : i32
    return %c0_i32, %c0_i32_0 : i32, i32
  }
  func.func @transform_8(%arg0: i32) -> i32 {
    %c0_i32 = arith.constant 0 : i32
    %c0_i32_0 = arith.constant 0 : i32
    return %c0_i32 : i32
  }
  func.func @transform_9(%arg0: i32) -> (i32, i32, i32) {
    %c0_i32 = arith.constant 0 : i32
    %c0_i32_0 = arith.constant 0 : i32
    %c0_i32_1 = arith.constant 0 : i32
    return %arg0, %c0_i32, %c0_i32_0 : i32, i32, i32
  }
}

</mosaic_0001>

<llo_original>
// kernel: tpu_custom_call.1
$region0: #{tpu_custom_call.1}
  #allocation0 [shape = 'u32[]', space=smem, size = 0x4, offset = 0x4, fixed_abs, tag = 'smem constant byte address 0x4 - core index']
  #allocation1 [shape = 'u32[72,128]{1,0:T(1,128)}', space=vmem, size = 0x9000, scoped, tag = 'internal scratch']
  #allocation2 [shape = 'f32[1]{0:T(128)S(6)}', space=smem, size = 0x200, scoped, tag = 'scoped memory for tpu_custom_call.1']
  %s0 = inlined_call_operand.vmem [shape: f32[8,20], index: 0, kind: input, shape index: {}]
  %s1 = inlined_call_operand.vmem [shape: f32[8,2], index: 1, kind: input, shape index: {}]
  %s2 = inlined_call_operand.hbm [shape: f32[20,128], index: 2, kind: input, shape index: {}]
  %s3 = inlined_call_operand.vmem [shape: f32[2,128], index: 3, kind: input, shape index: {}]
  %s4 = inlined_call_operand.vmem [shape: f32[1,128], index: 4, kind: input, shape index: {}]
  %s5 = inlined_call_operand.hbm [shape: f32[128,128], index: 5, kind: input, shape index: {}]
  %s6 = inlined_call_operand.vmem [shape: f32[1,128], index: 6, kind: input, shape index: {}]
  %s7 = inlined_call_operand.vmem [shape: f32[1,128], index: 7, kind: input, shape index: {}]
  %s8 = inlined_call_operand.<no memory space> [shape: f32[1], index: 8, kind: input, shape index: {}]
  %s9 = inlined_call_operand.hbm [shape: f32[1,1,8], index: 9, kind: output, shape index: {}]
  %s10 = sld [smem:[#allocation0]]
  $region54: #{tpu_custom_call.1} parent=0
    _
  %s12 = ssub.s32 1, %s10
  %s13 = scalar_select 0, %s12, %s10
  %14 = sst [smem:[#allocation2]] %s8
  $region1: #{tpu_custom_call.1} parent=0
    #allocation3 [shape = 'u8[12288]{0}', space=vmem, size = 0x3000, scoped, tag = 'input window, operand 2, single buffered']
    #allocation4 [shape = 's32[1]{0}', space=sflag, size = 0x4, scoped, tag = 'scoped memory for tpu_custom_call.1']
    #allocation5 [shape = 's32[1]{0}', space=sflag, size = 0x4, scoped, tag = 'scoped memory for tpu_custom_call.1']
    #allocation6 [shape = 'u8[65536]{0}', space=vmem, size = 0x10000, scoped, tag = 'input window, operand 5, single buffered']
    #allocation7 [shape = 's32[1]{0}', space=sflag, size = 0x4, scoped, tag = 'scoped memory for tpu_custom_call.1']
    #allocation8 [shape = 'u8[512]{0}', space=vmem, size = 0x400, scoped, tag = 'output window, operand 0, single buffered']
    %15 = vsyncpa [#allocation4], 0
    %16 = vsyncpa [#allocation7], 0
    %17 = vsyncpa [#allocation5], 0
    // Predicated region
    $region2: #{tpu_custom_call.1} parent=1 // pred_check
      _
    $region3: #{tpu_custom_call.1} parent=1 // pred_check_branch
      %19 = sbr.rel (0) target = $region5
    $region4: #{tpu_custom_call.1} parent=1 // pred_region
      _
    $region5: #{tpu_custom_call.1} parent=1 // pred_fallthru
      _
    // Predicated region
    $region6: #{tpu_custom_call.1} parent=1 // pred_check
      _
    $region7: #{tpu_custom_call.1} parent=1 // pred_check_branch
      %21 = sbr.rel (0) target = $region9
    $region8: #{tpu_custom_call.1} parent=1 // pred_region
      _
    $region9: #{tpu_custom_call.1} parent=1 // pred_fallthru
      _
    // Predicated region
    $region10: #{tpu_custom_call.1} parent=1 // pred_check
      _
    $region11: #{tpu_custom_call.1} parent=1 // pred_check_branch
      %23 = sbr.rel (0) target = $region13
    $region12: #{tpu_custom_call.1} parent=1 // pred_region
      %25 = vsyncadd [#allocation4], 0
      %s26 = sshll.u32 %s2, 4
      %s27 = int_to_ptr.hbm [resolvable:$true] %s26
      %s28 = sshll.u32 [#allocation3], 4
      %s29 = int_to_ptr.vmem [resolvable:$true] %s28
      %34 = dma.hbm_to_vmem [thread:$0]  %s27, 384, %s29, [#allocation4], 128, 128, 8
    $region13: #{tpu_custom_call.1} parent=1 // pred_fallthru
      _
    // Predicated region
    $region14: #{tpu_custom_call.1} parent=1 // pred_check
      _
    $region15: #{tpu_custom_call.1} parent=1 // pred_check_branch
      %36 = sbr.rel (0) target = $region17
    $region16: #{tpu_custom_call.1} parent=1 // pred_region
      _
    $region17: #{tpu_custom_call.1} parent=1 // pred_fallthru
      _
    // Predicated region
    $region18: #{tpu_custom_call.1} parent=1 // pred_check
      _
    $region19: #{tpu_custom_call.1} parent=1 // pred_check_branch
      %38 = sbr.rel (0) target = $region21
    $region20: #{tpu_custom_call.1} parent=1 // pred_region
      _
    $region21: #{tpu_custom_call.1} parent=1 // pred_fallthru
      _
    // Predicated region
    $region22: #{tpu_custom_call.1} parent=1 // pred_check
      _
    $region23: #{tpu_custom_call.1} parent=1 // pred_check_branch
      %40 = sbr.rel (0) target = $region25
    $region24: #{tpu_custom_call.1} parent=1 // pred_region
      %42 = vsyncadd [#allocation7], 0
      %s43 = sshll.u32 %s5, 4
      %s44 = int_to_ptr.hbm [resolvable:$true] %s43
      %s45 = sshll.u32 [#allocation6], 4
      %s46 = int_to_ptr.vmem [resolvable:$true] %s45
      %51 = dma.hbm_to_vmem [thread:$0]  %s44, 2048, %s46, [#allocation7], 128, 128, 8
    $region25: #{tpu_custom_call.1} parent=1 // pred_fallthru
      _
    // Predicated region
    $region26: #{tpu_custom_call.1} parent=1 // pred_check
      _
    $region27: #{tpu_custom_call.1} parent=1 // pred_check_branch
      %53 = sbr.rel (0) target = $region29
    $region28: #{tpu_custom_call.1} parent=1 // pred_region
      _
    $region29: #{tpu_custom_call.1} parent=1 // pred_fallthru
      _
    // Predicated region
    $region30: #{tpu_custom_call.1} parent=1 // pred_check
      _
    $region31: #{tpu_custom_call.1} parent=1 // pred_check_branch
      %55 = sbr.rel (0) target = $region33
    $region32: #{tpu_custom_call.1} parent=1 // pred_region
      _
    $region33: #{tpu_custom_call.1} parent=1 // pred_fallthru
      _
    // Predicated region
    $region34: #{tpu_custom_call.1} parent=1 // pred_check
      _
    $region35: #{tpu_custom_call.1} parent=1 // pred_check_branch
      %57 = sbr.rel (0) target = $region37
    $region36: #{tpu_custom_call.1} parent=1 // pred_region
      _
    $region37: #{tpu_custom_call.1} parent=1 // pred_fallthru
      _
    // Predicated region
    $region38: #{tpu_custom_call.1} parent=1 // pred_check
      _
    $region39: #{tpu_custom_call.1} parent=1 // pred_check_branch
      %59 = sbr.rel (0) target = $region41
    $region40: #{tpu_custom_call.1} parent=1 // pred_region
      %61 = dma.done [#allocation4], 384
    $region41: #{tpu_custom_call.1} parent=1 // pred_fallthru
      _
    // Predicated region
    $region42: #{tpu_custom_call.1} parent=1 // pred_check
      _
    $region43: #{tpu_custom_call.1} parent=1 // pred_check_branch
      %63 = sbr.rel (0) target = $region45
    $region44: #{tpu_custom_call.1} parent=1 // pred_region
      %65 = dma.done [#allocation7], 2048
    $region45: #{tpu_custom_call.1} parent=1 // pred_fallthru
      _
    %v66 = vld [vmem:[%s0] sm:$0xff]
    %v67 = vld [vmem:[#allocation3] sm:$0xff]
    %v68 = vld [vmem:[#allocation3 + $0x8] sm:$0xff]
    %v69 = vld [vmem:[#allocation3 + $0x10] sm:$0xf]
    %v70 = vld [vmem:[%s1] sm:$0xff]
    %v71 = vld [vmem:[%s3] sm:$0x3]
    %vm72 = vcmask 15360
    %v74 = vsel %vm72, %v70, 0
    %vm76 = vcmask 1041408
    %v78 = vsel %vm76, %v71, 0
    %80 = vmatpush.msra.mxu0 0.0
    %81 = vmatpush.msra.mxu0 0.0
    %82 = vmatpush.msra.mxu0 0.0
    %83 = vmatpush.msra.mxu0 0.0
    %84 = vmatpush.msra.mxu0 0.0
    %85 = vmatpush.msra.mxu0 0.0
    %86 = vmatpush.msra.mxu0 0.0
    %87 = vmatpush.msra.mxu0 0.0
    %88 = vmatpush.msra.mxu0 0.0
    %89 = vmatpush.msra.mxu0 0.0
    %90 = vmatpush.msra.mxu0 0.0
    %91 = vmatpush.msra.mxu0 0.0
    %92 = vmatpush.msra.mxu0 0.0
    %93 = vmatpush.msra.mxu0 0.0
    %94 = vmatpush.msra.mxu0 0.0
    %95 = vmatpush.msra.mxu0 %v78
    %96 = vmatmul.f32.gmra.mxu0 %v74
    %v97 = vpop.f32.mrf.mxu0
    %v98 = vadd.f32 0.0, %v97
    %99 = vdwg.mxu0
    %vm100 = vcmask 162816
    %v102 = vsel %vm100, %v66, 0
    %vm104 = vcmask 1043456
    %v106 = vsel %vm104, %v69, 0
    %108 = vmatpush.msra.mxu0 0.0
    %109 = vmatpush.msra.mxu0 0.0
    %110 = vmatpush.msra.mxu0 0.0
    %111 = vmatpush.msra.mxu0 0.0
    %112 = vmatpush.msra.mxu0 0.0
    %113 = vmatpush.msra.mxu0 0.0
    %114 = vmatpush.msra.mxu0 0.0
    %115 = vmatpush.msra.mxu0 0.0
    %116 = vmatpush.msra.mxu0 0.0
    %117 = vmatpush.msra.mxu0 0.0
    %118 = vmatpush.msra.mxu0 0.0
    %119 = vmatpush.msra.mxu0 0.0
    %120 = vmatpush.msra.mxu0 0.0
    %121 = vmatpush.msra.mxu0 %v106
    %122 = vmatpush.msra.mxu0 %v68
    %123 = vmatpush.msra.mxu0 %v67
    %124 = vmatmul.f32.gmra.mxu0 %v102
    %v125 = vpop.f32.mrf.mxu0
    %v126 = vadd.f32 %v98, %v125
    %127 = vdwg.mxu0
    %v128 = vld [vmem:[%s4] sm:$0x1]
    %v130 = vperm.slane %v128, 0
    %v132 = vadd.f32 %v126, %v130
    %v133 = vmax.f32 %v132, 0.0
    %v134 = vld [vmem:[#allocation6] sm:$0xff]
    %v135 = vld [vmem:[#allocation6 + $0x8] sm:$0xff]
    %v136 = vld [vmem:[#allocation6 + $0x10] sm:$0xff]
    %v137 = vld [vmem:[#allocation6 + $0x18] sm:$0xff]
    %v138 = vld [vmem:[#allocation6 + $0x20] sm:$0xff]
    %v139 = vld [vmem:[#allocation6 + $0x28] sm:$0xff]
    %v140 = vld [vmem:[#allocation6 + $0x30] sm:$0xff]
    %v141 = vld [vmem:[#allocation6 + $0x38] sm:$0xff]
    %v142 = vld [vmem:[#allocation6 + $0x40] sm:$0xff]
    %v143 = vld [vmem:[#allocation6 + $0x48] sm:$0xff]
    %v144 = vld [vmem:[#allocation6 + $0x50] sm:$0xff]
    %v145 = vld [vmem:[#allocation6 + $0x58] sm:$0xff]
    %v146 = vld [vmem:[#allocation6 + $0x60] sm:$0xff]
    %v147 = vld [vmem:[#allocation6 + $0x68] sm:$0xff]
    %v148 = vld [vmem:[#allocation6 + $0x70] sm:$0xff]
    %v149 = vld [vmem:[#allocation6 + $0x78] sm:$0xff]
    %v150 = vld [vmem:[%s6] sm:$0x1]
    %v152 = vperm.slane %v150, 0
    %154 = vmatpush.msra.mxu0 %v149
    %155 = vmatpush.msra.mxu0 %v148
    %156 = vmatpush.msra.mxu0 %v147
    %157 = vmatpush.msra.mxu0 %v146
    %158 = vmatpush.msra.mxu0 %v145
    %159 = vmatpush.msra.mxu0 %v144
    %160 = vmatpush.msra.mxu0 %v143
    %161 = vmatpush.msra.mxu0 %v142
    %162 = vmatpush.msra.mxu0 %v141
    %163 = vmatpush.msra.mxu0 %v140
    %164 = vmatpush.msra.mxu0 %v139
    %165 = vmatpush.msra.mxu0 %v138
    %166 = vmatpush.msra.mxu0 %v137
    %167 = vmatpush.msra.mxu0 %v136
    %168 = vmatpush.msra.mxu0 %v135
    %169 = vmatpush.msra.mxu0 %v134
    %170 = vmatmul.f32.gmra.mxu0 %v133
    %v171 = vpop.f32.mrf.mxu0
    %v172 = vadd.f32 %v152, %v171
    %173 = vdwg.mxu0
    %v174 = vmax.f32 %v172, 0.0
    %v175 = vld [vmem:[%s7] sm:$0x1]
    %s176 = sld [smem:[#allocation2]]
    %v177 = vstv %s176
    %178 = vmatpush.xpose.msra.mxu0 0.0
    %179 = vmatpush.xpose.msra.mxu0 0.0
    %180 = vmatpush.xpose.msra.mxu0 0.0
    %181 = vmatpush.xpose.msra.mxu0 0.0
    %182 = vmatpush.xpose.msra.mxu0 0.0
    %183 = vmatpush.xpose.msra.mxu0 0.0
    %184 = vmatpush.xpose.msra.mxu0 0.0
    %185 = vmatpush.xpose.msra.mxu0 0.0
    %186 = vmatpush.xpose.msra.mxu0 0.0
    %187 = vmatpush.xpose.msra.mxu0 0.0
    %188 = vmatpush.xpose.msra.mxu0 0.0
    %189 = vmatpush.xpose.msra.mxu0 0.0
    %190 = vmatpush.xpose.msra.mxu0 0.0
    %191 = vmatpush.xpose.msra.mxu0 0.0
    %192 = vmatpush.xpose.msra.mxu0 0.0
    %193 = vmatpush.xpose.msra.mxu0 %v174
    %194 = vmatmul.f32.gmra.mxu0 %v175
    %v195 = vpop.f32.mrf.mxu0
    %v196 = vadd.f32 %v177, %v195
    %197 = vdwg.mxu0
    %vm198 = vcmask 57344
    %199 = vst.msk [vmem:[#allocation8] sm:$0x1] %vm198, %v196
    // Predicated region
    $region46: #{tpu_custom_call.1} parent=1 // pred_check
      _
    $region47: #{tpu_custom_call.1} parent=1 // pred_check_branch
      %201 = sbr.rel (0) target = $region49
    $region48: #{tpu_custom_call.1} parent=1 // pred_region
      %203 = vsyncadd [#allocation5], 0
      %s205 = sshll.u32 [#allocation8], 4
      %s206 = int_to_ptr.vmem [resolvable:$true] %s205
      %s207 = sshll.u32 %s9, 4
      %s208 = int_to_ptr.hbm [resolvable:$true] %s207
      %210 = dma.vmem_to_hbm [thread:$0]  %s206, 16, %s208, [#allocation5]
    $region49: #{tpu_custom_call.1} parent=1 // pred_fallthru
      _
    // Predicated region
    $region50: #{tpu_custom_call.1} parent=1 // pred_check
      _
    $region51: #{tpu_custom_call.1} parent=1 // pred_check_branch
      %212 = sbr.rel (0) target = $region53
    $region52: #{tpu_custom_call.1} parent=1 // pred_region
      %214 = dma.done [#allocation5], 16
    $region53: #{tpu_custom_call.1} parent=1 // pred_fallthru
      _
    %215 = vsyncpa [#allocation4], 1
    %216 = vsyncpa [#allocation7], 1
    %217 = vsyncpa [#allocation5], 1

</llo_original>
